<compile_context>
chip_gen: v7x
topology: tpu7x:2x2x1
jax: 0.10.0
libtpu: 0.0.40
codegen_flags: <defaults>
</compile_context>

<pallas_src>
import jax
import jax.numpy as jnp
from jax.experimental import pallas as pl
from jax.experimental.pallas import tpu as pltpu

# Dims implied by the module: input (B, 2, 2, 2) so that 4*2*2 = 16 feeds fc1.
C_IN, C_MID, C_OUT = 2, 8, 4
H = W = 2
HW = H * W
F_IN = C_IN * HW          # 8   NCHW-flattened input features
F_MID = C_MID * HW        # 32  conv1 output features (channel-major)
F_CONV = C_OUT * HW       # 16  conv2 output features == fc1 input
F_FC1 = 16
F_FC2 = 4

# Parameter-slab layout (rows x 32 lanes, f32); every section starts on an
# 8-sublane boundary so in-kernel ref slices stay aligned.
SLAB_COLS = 32
_R_W1, _R_B1 = 0, 8        # conv1 folded to (8, 32) matmul + bias row
_R_W2, _R_B2 = 16, 48      # conv2 folded to (32, 16) matmul + bias row
_R_FW1, _R_FB1 = 56, 72    # fc1 (16, 16) + bias row
_R_FW2, _R_FB2 = 80, 96    # fc2 (16, 4)  + bias row
SLAB_ROWS = 104


# ----------------------- Pallas kernel -----------------------

def fused_forward_kernel(x_ref, p_ref, o_ref):
    # x_ref: (B, 8) NCHW-flattened input;  p_ref: (104, 32) packed parameter slab.
    x = x_ref[...]

    # conv1 (1x1, 2->8) as a block-diagonal (8, 32) matmul on the MXU, + bias + ReLU.
    h = jnp.dot(x, p_ref[_R_W1:_R_W1 + F_IN, :F_MID],
                preferred_element_type=jnp.float32)
    h = jnp.maximum(h + p_ref[_R_B1:_R_B1 + 1, :F_MID], 0.0)

    # conv2 (1x1, 8->4) as a block-diagonal (32, 16) matmul, + bias + ReLU.
    h = jnp.dot(h, p_ref[_R_W2:_R_W2 + F_MID, :F_CONV],
                preferred_element_type=jnp.float32)
    h = jnp.maximum(h + p_ref[_R_B2:_R_B2 + 1, :F_CONV], 0.0)

    # fc1 (16 -> 16) + ReLU.  Channel-major flatten is the native layout here,
    # so no weight permutation and no runtime reshuffle is needed.
    h = jnp.dot(h, p_ref[_R_FW1:_R_FW1 + F_CONV, :F_FC1],
                preferred_element_type=jnp.float32)
    h = jnp.maximum(h + p_ref[_R_FB1:_R_FB1 + 1, :F_FC1], 0.0)

    # fc2 (16 -> 4).
    o = jnp.dot(h, p_ref[_R_FW2:_R_FW2 + F_FC1, :F_FC2],
                preferred_element_type=jnp.float32)
    o_ref[...] = o + p_ref[_R_FB2:_R_FB2 + 1, :F_FC2]


# ----------------------- host-side parameter handling -----------------------

def init_params(key):
    """Parameters in PyTorch layout: conv (C_out, C_in, 1, 1), linear (out, in)."""
    ks = jax.random.split(key, 8)
    s = 0.1
    return {
        "conv1_w": s * jax.random.normal(ks[0], (C_MID, C_IN, 1, 1), jnp.float32),
        "conv1_b": s * jax.random.normal(ks[1], (C_MID,), jnp.float32),
        "conv2_w": s * jax.random.normal(ks[2], (C_OUT, C_MID, 1, 1), jnp.float32),
        "conv2_b": s * jax.random.normal(ks[3], (C_OUT,), jnp.float32),
        "fc1_w": s * jax.random.normal(ks[4], (F_FC1, F_CONV), jnp.float32),
        "fc1_b": s * jax.random.normal(ks[5], (F_FC1,), jnp.float32),
        "fc2_w": s * jax.random.normal(ks[6], (F_FC2, F_FC1), jnp.float32),
        "fc2_b": s * jax.random.normal(ks[7], (F_FC2,), jnp.float32),
    }


def pack_params(params):
    """One-time host-side fold + pack.

    The 1x1 convs become block-diagonal matmuls over NCHW-flattened features:
      W1_big[c*HW + p, o*HW + q] = conv1_w[o, c] * delta(p, q)   (Kronecker product)
    so the per-batch feature vector stays in PyTorch's channel-major order end-to-end.
    Everything is packed into a single sublane-aligned f32 slab (one DMA, one operand).
    """
    eye = jnp.eye(HW, dtype=jnp.float32)
    w1 = params["conv1_w"].reshape(C_MID, C_IN)    # (8, 2)  [out, in]
    w2 = params["conv2_w"].reshape(C_OUT, C_MID)   # (4, 8)
    w1_big = jnp.kron(w1.T, eye)                   # (8, 32)
    b1_big = jnp.repeat(params["conv1_b"], HW)     # (32,)
    w2_big = jnp.kron(w2.T, eye)                   # (32, 16)
    b2_big = jnp.repeat(params["conv2_b"], HW)     # (16,)

    slab = jnp.zeros((SLAB_ROWS, SLAB_COLS), jnp.float32)
    slab = slab.at[_R_W1:_R_W1 + F_IN, :F_MID].set(w1_big)
    slab = slab.at[_R_B1, :F_MID].set(b1_big)
    slab = slab.at[_R_W2:_R_W2 + F_MID, :F_CONV].set(w2_big)
    slab = slab.at[_R_B2, :F_CONV].set(b2_big)
    slab = slab.at[_R_FW1:_R_FW1 + F_CONV, :F_FC1].set(params["fc1_w"].T)
    slab = slab.at[_R_FB1, :F_FC1].set(params["fc1_b"])
    slab = slab.at[_R_FW2:_R_FW2 + F_FC1, :F_FC2].set(params["fc2_w"].T)
    slab = slab.at[_R_FB2, :F_FC2].set(params["fc2_b"])
    return slab


# ----------------------- forward wrappers -----------------------

@jax.jit
def forward(x, slab):
    # x: NCHW (B, 2, 2, 2). Contiguous reshape to (B, 8) is a free view (no transpose).
    b = x.shape[0]
    x_flat = x.reshape(b, F_IN)
    out = pl.pallas_call(
        fused_forward_kernel,
        out_shape=jax.ShapeDtypeStruct((b, F_FC2), jnp.float32),
        in_specs=[pl.BlockSpec(memory_space=pltpu.MemorySpace.VMEM),
                  pl.BlockSpec(memory_space=pltpu.MemorySpace.VMEM)],
        out_specs=pl.BlockSpec(memory_space=pltpu.MemorySpace.VMEM),
        cost_estimate=pl.CostEstimate(
            flops=2 * b * (F_IN * F_MID + F_MID * F_CONV
                           + F_CONV * F_FC1 + F_FC1 * F_FC2),
            transcendentals=0,
            bytes_accessed=4 * (b * F_IN + SLAB_ROWS * SLAB_COLS + b * F_FC2)),
    )(x_flat, slab)
    # PyTorch module ends with x.view(-1, 2, 2): (B, 4) -> (B, 2, 2).
    return out.reshape(-1, 2, 2)


def forward_ref(x, params):
    """Pure-JAX reference reproducing the PyTorch module exactly (correctness check)."""
    b = x.shape[0]
    w1 = params["conv1_w"].reshape(C_MID, C_IN)
    w2 = params["conv2_w"].reshape(C_OUT, C_MID)
    h = jnp.einsum("bchw,oc->bohw", x, w1) + params["conv1_b"][None, :, None, None]
    h = jnp.maximum(h, 0.0)
    h = jnp.einsum("bchw,oc->bohw", h, w2) + params["conv2_b"][None, :, None, None]
    h = jnp.maximum(h, 0.0)
    y = h.reshape(b, -1)                                    # channel-major flatten (NCHW)
    y = jnp.maximum(y @ params["fc1_w"].T + params["fc1_b"], 0.0)
    z = y @ params["fc2_w"].T + params["fc2_b"]
    return z.reshape(-1, 2, 2)


if __name__ == "__main__":
    key = jax.random.PRNGKey(0)
    pkey, xkey = jax.random.split(key)
    params = init_params(pkey)
    slab = pack_params(params)

    # Input implied by the module: (B, 2, 2, 2) so that 4*2*2 = 16 features feed fc1.
    x = jax.random.normal(xkey, (2, C_IN, H, W), jnp.float32)

    out = jax.block_until_ready(forward(x, slab))
    ref = forward_ref(x, params)

    assert out.shape == (2, 2, 2)
    assert jnp.allclose(out, ref, atol=1e-5, rtol=1e-5)

    print("KERNEL_OK")
</pallas_src>

<mosaic_0001>
module attributes {stable_mosaic.version = 11 : i64} {
  func.func @fused_forward_kernel(%arg0: memref<2x8xf32, #tpu.memory_space<vmem>>, %arg1: memref<104x32xf32, #tpu.memory_space<vmem>>, %arg2: memref<2x4xf32, #tpu.memory_space<vmem>>) attributes {dimension_semantics = [], scalar_prefetch = 0 : i64, scratch_operands = 0 : i64, tpu.core_type = #tpu.core_type<tc>} {
    %c0 = arith.constant 0 : index
    %c0_0 = arith.constant 0 : index
    %0 = vector.load %arg0[%c0, %c0_0] : memref<2x8xf32, #tpu.memory_space<vmem>>, vector<2x8xf32>
    %c0_1 = arith.constant 0 : index
    %c0_2 = arith.constant 0 : index
    %1 = vector.load %arg1[%c0_1, %c0_2] : memref<104x32xf32, #tpu.memory_space<vmem>>, vector<8x32xf32>
    %cst = arith.constant dense<0.000000e+00> : vector<2x32xf32>
    %2 = tpu.matmul %0, %1, %cst {dimension_numbers = #tpu.dot_dimension_numbers<[1], [0], [0], [1], [0, 0, 1, 1], [], []>} : vector<2x8xf32>, vector<8x32xf32>, vector<2x32xf32> -> vector<2x32xf32>
    %c8 = arith.constant 8 : index
    %c0_3 = arith.constant 0 : index
    %3 = vector.load %arg1[%c8, %c0_3] : memref<104x32xf32, #tpu.memory_space<vmem>>, vector<1x32xf32>
    %4 = vector.broadcast %3 : vector<1x32xf32> to vector<2x32xf32>
    %5 = arith.addf %2, %4 : vector<2x32xf32>
    %cst_4 = arith.constant 0.000000e+00 : f32
    %6 = vector.broadcast %cst_4 : f32 to vector<2x32xf32>
    %7 = arith.maximumf %5, %6 : vector<2x32xf32>
    %c16 = arith.constant 16 : index
    %c0_5 = arith.constant 0 : index
    %8 = vector.load %arg1[%c16, %c0_5] : memref<104x32xf32, #tpu.memory_space<vmem>>, vector<32x16xf32>
    %cst_6 = arith.constant dense<0.000000e+00> : vector<2x16xf32>
    %9 = tpu.matmul %7, %8, %cst_6 {dimension_numbers = #tpu.dot_dimension_numbers<[1], [0], [0], [1], [0, 0, 1, 1], [], []>} : vector<2x32xf32>, vector<32x16xf32>, vector<2x16xf32> -> vector<2x16xf32>
    %c48 = arith.constant 48 : index
    %c0_7 = arith.constant 0 : index
    %10 = vector.load %arg1[%c48, %c0_7] : memref<104x32xf32, #tpu.memory_space<vmem>>, vector<1x16xf32>
    %11 = vector.broadcast %10 : vector<1x16xf32> to vector<2x16xf32>
    %12 = arith.addf %9, %11 : vector<2x16xf32>
    %cst_8 = arith.constant 0.000000e+00 : f32
    %13 = vector.broadcast %cst_8 : f32 to vector<2x16xf32>
    %14 = arith.maximumf %12, %13 : vector<2x16xf32>
    %c56 = arith.constant 56 : index
    %c0_9 = arith.constant 0 : index
    %15 = vector.load %arg1[%c56, %c0_9] : memref<104x32xf32, #tpu.memory_space<vmem>>, vector<16x16xf32>
    %cst_10 = arith.constant dense<0.000000e+00> : vector<2x16xf32>
    %16 = tpu.matmul %14, %15, %cst_10 {dimension_numbers = #tpu.dot_dimension_numbers<[1], [0], [0], [1], [0, 0, 1, 1], [], []>} : vector<2x16xf32>, vector<16x16xf32>, vector<2x16xf32> -> vector<2x16xf32>
    %c72 = arith.constant 72 : index
    %c0_11 = arith.constant 0 : index
    %17 = vector.load %arg1[%c72, %c0_11] : memref<104x32xf32, #tpu.memory_space<vmem>>, vector<1x16xf32>
    %18 = vector.broadcast %17 : vector<1x16xf32> to vector<2x16xf32>
    %19 = arith.addf %16, %18 : vector<2x16xf32>
    %cst_12 = arith.constant 0.000000e+00 : f32
    %20 = vector.broadcast %cst_12 : f32 to vector<2x16xf32>
    %21 = arith.maximumf %19, %20 : vector<2x16xf32>
    %c80 = arith.constant 80 : index
    %c0_13 = arith.constant 0 : index
    %22 = vector.load %arg1[%c80, %c0_13] : memref<104x32xf32, #tpu.memory_space<vmem>>, vector<16x4xf32>
    %cst_14 = arith.constant dense<0.000000e+00> : vector<2x4xf32>
    %23 = tpu.matmul %21, %22, %cst_14 {dimension_numbers = #tpu.dot_dimension_numbers<[1], [0], [0], [1], [0, 0, 1, 1], [], []>} : vector<2x16xf32>, vector<16x4xf32>, vector<2x4xf32> -> vector<2x4xf32>
    %c96 = arith.constant 96 : index
    %c0_15 = arith.constant 0 : index
    %24 = vector.load %arg1[%c96, %c0_15] : memref<104x32xf32, #tpu.memory_space<vmem>>, vector<1x4xf32>
    %25 = vector.broadcast %24 : vector<1x4xf32> to vector<2x4xf32>
    %26 = arith.addf %23, %25 : vector<2x4xf32>
    %c0_16 = arith.constant 0 : index
    %c0_17 = arith.constant 0 : index
    %27 = vector.load %arg2[%c0_16, %c0_17] : memref<2x4xf32, #tpu.memory_space<vmem>>, vector<2x4xf32>
    tpu.vector_store %arg2[%c0_16, %c0_17], %26 {strides = array<i32>} : memref<2x4xf32, #tpu.memory_space<vmem>>, vector<2x4xf32>,
    return
  }
}

</mosaic_0001>

<llo_original>
// kernel: forward.1
$region0: #{forward.1}
  #allocation0 [shape = 'u32[]', space=smem, size = 0x4, offset = 0x4, fixed_abs, tag = 'smem constant byte address 0x4 - core index']
  #allocation1 [shape = 'u32[144,128]{1,0:T(1,128)}', space=vmem, size = 0x12000, scoped, tag = 'internal scratch']
  %s0 = inlined_call_operand.vmem [shape: f32[2,8], index: 0, kind: input, shape index: {}]
  %s1 = inlined_call_operand.vmem [shape: f32[104,32], index: 1, kind: input, shape index: {}]
  %s2 = inlined_call_operand.vmem [shape: f32[2,4], index: 2, kind: output, shape index: {}]
  %s3 = sld [smem:[#allocation0]]
  $region18: #{forward.1} parent=0
    _
  %s5 = ssub.s32 1, %s3
  %s6 = scalar_select 0, %s5, %s3
  // Predicated region
  $region2: #{forward.1} parent=0 // pred_check
    _
  $region3: #{forward.1} parent=0 // pred_check_branch
    %8 = sbr.rel (0) target = $region5
  $region4: #{forward.1} parent=0 // pred_region
    _
  $region5: #{forward.1} parent=0 // pred_fallthru
    _
  // Predicated region
  $region6: #{forward.1} parent=0 // pred_check
    _
  $region7: #{forward.1} parent=0 // pred_check_branch
    %10 = sbr.rel (0) target = $region9
  $region8: #{forward.1} parent=0 // pred_region
    _
  $region9: #{forward.1} parent=0 // pred_fallthru
    _
  %v11 = vld [vmem:[%s0] sm:$0x3]
  %v12 = vld [vmem:[%s1] sm:$0xff]
  %v13 = vld [vmem:[%s1 + $0x8] sm:$0x1]
  %v14 = vlaneseq
  %v15 = vshrl.u32 %v14, 7
  %v16 = vsub.s32 0, %v15
  %v17 = vrot.slane %v13, %v16
  %vm18 = vcmask 64512
  %v20 = vsel %vm18, %v11, 0
  %22 = vmatprep.subr.mxu0 0.0
  %23 = vmatpush1.msra.mxu0 %v12
  %24 = vmatprep.subr.mxu0 0.0
  %25 = vmatpush1.msra.mxu0 0.0
  %26 = vmatprep.subr.mxu0 0.0
  %27 = vmatpush1.msra.mxu0 0.0
  %28 = vmatprep.subr.mxu0 0.0
  %29 = vmatpush1.msra.mxu0 0.0
  %30 = vmatprep.subr.mxu0 0.0
  %31 = vmatpush1.msra.mxu0 0.0
  %32 = vmatprep.subr.mxu0 0.0
  %33 = vmatpush1.msra.mxu0 0.0
  %34 = vmatprep.subr.mxu0 0.0
  %35 = vmatpush1.msra.mxu0 0.0
  %36 = vmatprep.subr.mxu0 0.0
  %37 = vmatpush1.msra.mxu0 0.0
  %38 = vmatprep.subr.mxu0 0.0
  %39 = vmatpush1.msra.mxu0 0.0
  %40 = vmatprep.subr.mxu0 0.0
  %41 = vmatpush1.msra.mxu0 0.0
  %42 = vmatprep.subr.mxu0 0.0
  %43 = vmatpush1.msra.mxu0 0.0
  %44 = vmatprep.subr.mxu0 0.0
  %45 = vmatpush1.msra.mxu0 0.0
  %46 = vmatprep.subr.mxu0 0.0
  %47 = vmatpush1.msra.mxu0 0.0
  %48 = vmatprep.subr.mxu0 0.0
  %49 = vmatpush1.msra.mxu0 0.0
  %50 = vmatprep.subr.mxu0 0.0
  %51 = vmatpush1.msra.mxu0 0.0
  %52 = vmatprep.subr.mxu0 0.0
  %53 = vmatpush1.msra.mxu0 0.0
  %54 = vmatprep.subr.mxu0 0.0
  %55 = vmatpush1.msra.mxu0 0.0
  %56 = vmatprep.subr.mxu0 0.0
  %57 = vmatpush1.msra.mxu0 0.0
  %58 = vmatprep.subr.mxu0 0.0
  %59 = vmatpush1.msra.mxu0 0.0
  %60 = vmatprep.subr.mxu0 0.0
  %61 = vmatpush1.msra.mxu0 0.0
  %62 = vmatprep.subr.mxu0 0.0
  %63 = vmatpush1.msra.mxu0 0.0
  %64 = vmatprep.subr.mxu0 0.0
  %65 = vmatpush1.msra.mxu0 0.0
  %66 = vmatprep.subr.mxu0 0.0
  %67 = vmatpush1.msra.mxu0 0.0
  %68 = vmatprep.subr.mxu0 0.0
  %69 = vmatpush1.msra.mxu0 0.0
  %70 = vmatprep.subr.mxu0 0.0
  %71 = vmatpush1.msra.mxu0 0.0
  %72 = vmatprep.subr.mxu0 0.0
  %73 = vmatpush1.msra.mxu0 0.0
  %74 = vmatprep.subr.mxu0 0.0
  %75 = vmatpush1.msra.mxu0 0.0
  %76 = vmatprep.subr.mxu0 0.0
  %77 = vmatpush1.msra.mxu0 0.0
  %78 = vmatprep.subr.mxu0 0.0
  %79 = vmatpush1.msra.mxu0 0.0
  %80 = vmatprep.subr.mxu0 0.0
  %81 = vmatpush1.msra.mxu0 0.0
  %82 = vmatprep.subr.mxu0 0.0
  %83 = vmatpush1.msra.mxu0 0.0
  %84 = vmatprep.subr.mxu0 0.0
  %85 = vmatpush1.msra.mxu0 0.0
  %86 = vmatprep.mubr.f32.mxu0 0.0
  %87 = vmatmul.mubr.f32.gmra.mrb[0].mxu0 %v20
  %v88 = vpop.f32.mrb[0].mxu0
  %v89 = vadd.f32 %v17, %v88
  %v90 = vpop.f32.mrb[0].mxu0
  %91 = vdwg.mxu0
  %v92 = vmax.f32 %v89, 0.0
  %v93 = vld [vmem:[%s1 + $0x10] sm:$0xff]
  %v94 = vld [vmem:[%s1 + $0x18] sm:$0xff]
  %v95 = vld [vmem:[%s1 + $0x20] sm:$0xff]
  %v96 = vld [vmem:[%s1 + $0x28] sm:$0xff]
  %v97 = vld [vmem:[%s1 + $0x30] sm:$0x1]
  %v98 = vlaneseq
  %v99 = vshrl.u32 %v98, 7
  %v100 = vsub.s32 0, %v99
  %v101 = vrot.slane %v97, %v100
  %vm102 = vcmask 261120
  %v104 = vsel %vm102, %v92, 0
  %106 = vmatprep.subr.mxu0 0.0
  %107 = vmatpush1.msra.mxu0 %v93
  %108 = vmatprep.subr.mxu0 0.0
  %109 = vmatpush1.msra.mxu0 %v94
  %110 = vmatprep.subr.mxu0 0.0
  %111 = vmatpush1.msra.mxu0 %v95
  %112 = vmatprep.subr.mxu0 0.0
  %113 = vmatpush1.msra.mxu0 %v96
  %114 = vmatprep.subr.mxu0 0.0
  %115 = vmatpush1.msra.mxu0 0.0
  %116 = vmatprep.subr.mxu0 0.0
  %117 = vmatpush1.msra.mxu0 0.0
  %118 = vmatprep.subr.mxu0 0.0
  %119 = vmatpush1.msra.mxu0 0.0
  %120 = vmatprep.subr.mxu0 0.0
  %121 = vmatpush1.msra.mxu0 0.0
  %122 = vmatprep.subr.mxu0 0.0
  %123 = vmatpush1.msra.mxu0 0.0
  %124 = vmatprep.subr.mxu0 0.0
  %125 = vmatpush1.msra.mxu0 0.0
  %126 = vmatprep.subr.mxu0 0.0
  %127 = vmatpush1.msra.mxu0 0.0
  %128 = vmatprep.subr.mxu0 0.0
  %129 = vmatpush1.msra.mxu0 0.0
  %130 = vmatprep.subr.mxu0 0.0
  %131 = vmatpush1.msra.mxu0 0.0
  %132 = vmatprep.subr.mxu0 0.0
  %133 = vmatpush1.msra.mxu0 0.0
  %134 = vmatprep.subr.mxu0 0.0
  %135 = vmatpush1.msra.mxu0 0.0
  %136 = vmatprep.subr.mxu0 0.0
  %137 = vmatpush1.msra.mxu0 0.0
  %138 = vmatprep.subr.mxu0 0.0
  %139 = vmatpush1.msra.mxu0 0.0
  %140 = vmatprep.subr.mxu0 0.0
  %141 = vmatpush1.msra.mxu0 0.0
  %142 = vmatprep.subr.mxu0 0.0
  %143 = vmatpush1.msra.mxu0 0.0
  %144 = vmatprep.subr.mxu0 0.0
  %145 = vmatpush1.msra.mxu0 0.0
  %146 = vmatprep.subr.mxu0 0.0
  %147 = vmatpush1.msra.mxu0 0.0
  %148 = vmatprep.subr.mxu0 0.0
  %149 = vmatpush1.msra.mxu0 0.0
  %150 = vmatprep.subr.mxu0 0.0
  %151 = vmatpush1.msra.mxu0 0.0
  %152 = vmatprep.subr.mxu0 0.0
  %153 = vmatpush1.msra.mxu0 0.0
  %154 = vmatprep.subr.mxu0 0.0
  %155 = vmatpush1.msra.mxu0 0.0
  %156 = vmatprep.subr.mxu0 0.0
  %157 = vmatpush1.msra.mxu0 0.0
  %158 = vmatprep.subr.mxu0 0.0
  %159 = vmatpush1.msra.mxu0 0.0
  %160 = vmatprep.subr.mxu0 0.0
  %161 = vmatpush1.msra.mxu0 0.0
  %162 = vmatprep.subr.mxu0 0.0
  %163 = vmatpush1.msra.mxu0 0.0
  %164 = vmatprep.subr.mxu0 0.0
  %165 = vmatpush1.msra.mxu0 0.0
  %166 = vmatprep.subr.mxu0 0.0
  %167 = vmatpush1.msra.mxu0 0.0
  %168 = vmatprep.subr.mxu0 0.0
  %169 = vmatpush1.msra.mxu0 0.0
  %170 = vmatprep.mubr.f32.mxu0 0.0
  %171 = vmatmul.mubr.f32.gmra.mrb[0].mxu0 %v104
  %v172 = vpop.f32.mrb[0].mxu0
  %v173 = vadd.f32 %v101, %v172
  %v174 = vpop.f32.mrb[0].mxu0
  %175 = vdwg.mxu0
  %v176 = vmax.f32 %v173, 0.0
  %v177 = vld [vmem:[%s1 + $0x38] sm:$0xff]
  %v178 = vld [vmem:[%s1 + $0x40] sm:$0xff]
  %v179 = vld [vmem:[%s1 + $0x48] sm:$0x1]
  %v180 = vlaneseq
  %v181 = vshrl.u32 %v180, 7
  %v182 = vsub.s32 0, %v181
  %v183 = vrot.slane %v179, %v182
  %vm184 = vcmask 130048
  %v186 = vsel %vm184, %v176, 0
  %188 = vmatprep.subr.mxu0 0.0
  %189 = vmatpush1.msra.mxu0 %v177
  %190 = vmatprep.subr.mxu0 0.0
  %191 = vmatpush1.msra.mxu0 %v178
  %192 = vmatprep.subr.mxu0 0.0
  %193 = vmatpush1.msra.mxu0 0.0
  %194 = vmatprep.subr.mxu0 0.0
  %195 = vmatpush1.msra.mxu0 0.0
  %196 = vmatprep.subr.mxu0 0.0
  %197 = vmatpush1.msra.mxu0 0.0
  %198 = vmatprep.subr.mxu0 0.0
  %199 = vmatpush1.msra.mxu0 0.0
  %200 = vmatprep.subr.mxu0 0.0
  %201 = vmatpush1.msra.mxu0 0.0
  %202 = vmatprep.subr.mxu0 0.0
  %203 = vmatpush1.msra.mxu0 0.0
  %204 = vmatprep.subr.mxu0 0.0
  %205 = vmatpush1.msra.mxu0 0.0
  %206 = vmatprep.subr.mxu0 0.0
  %207 = vmatpush1.msra.mxu0 0.0
  %208 = vmatprep.subr.mxu0 0.0
  %209 = vmatpush1.msra.mxu0 0.0
  %210 = vmatprep.subr.mxu0 0.0
  %211 = vmatpush1.msra.mxu0 0.0
  %212 = vmatprep.subr.mxu0 0.0
  %213 = vmatpush1.msra.mxu0 0.0
  %214 = vmatprep.subr.mxu0 0.0
  %215 = vmatpush1.msra.mxu0 0.0
  %216 = vmatprep.subr.mxu0 0.0
  %217 = vmatpush1.msra.mxu0 0.0
  %218 = vmatprep.subr.mxu0 0.0
  %219 = vmatpush1.msra.mxu0 0.0
  %220 = vmatprep.subr.mxu0 0.0
  %221 = vmatpush1.msra.mxu0 0.0
  %222 = vmatprep.subr.mxu0 0.0
  %223 = vmatpush1.msra.mxu0 0.0
  %224 = vmatprep.subr.mxu0 0.0
  %225 = vmatpush1.msra.mxu0 0.0
  %226 = vmatprep.subr.mxu0 0.0
  %227 = vmatpush1.msra.mxu0 0.0
  %228 = vmatprep.subr.mxu0 0.0
  %229 = vmatpush1.msra.mxu0 0.0
  %230 = vmatprep.subr.mxu0 0.0
  %231 = vmatpush1.msra.mxu0 0.0
  %232 = vmatprep.subr.mxu0 0.0
  %233 = vmatpush1.msra.mxu0 0.0
  %234 = vmatprep.subr.mxu0 0.0
  %235 = vmatpush1.msra.mxu0 0.0
  %236 = vmatprep.subr.mxu0 0.0
  %237 = vmatpush1.msra.mxu0 0.0
  %238 = vmatprep.subr.mxu0 0.0
  %239 = vmatpush1.msra.mxu0 0.0
  %240 = vmatprep.subr.mxu0 0.0
  %241 = vmatpush1.msra.mxu0 0.0
  %242 = vmatprep.subr.mxu0 0.0
  %243 = vmatpush1.msra.mxu0 0.0
  %244 = vmatprep.subr.mxu0 0.0
  %245 = vmatpush1.msra.mxu0 0.0
  %246 = vmatprep.subr.mxu0 0.0
  %247 = vmatpush1.msra.mxu0 0.0
  %248 = vmatprep.subr.mxu0 0.0
  %249 = vmatpush1.msra.mxu0 0.0
  %250 = vmatprep.subr.mxu0 0.0
  %251 = vmatpush1.msra.mxu0 0.0
  %252 = vmatprep.mubr.f32.mxu0 0.0
  %253 = vmatmul.mubr.f32.gmra.mrb[0].mxu0 %v186
  %v254 = vpop.f32.mrb[0].mxu0
  %v255 = vadd.f32 %v183, %v254
  %v256 = vpop.f32.mrb[0].mxu0
  %257 = vdwg.mxu0
  %v258 = vmax.f32 %v255, 0.0
  %v259 = vld [vmem:[%s1 + $0x50] sm:$0xff]
  %v260 = vld [vmem:[%s1 + $0x58] sm:$0xff]
  %v261 = vld [vmem:[%s1 + $0x60] sm:$0x1]
  %v262 = vlaneseq
  %v263 = vshrl.u32 %v262, 7
  %v264 = vsub.s32 0, %v263
  %v265 = vrot.slane %v261, %v264
  %v267 = vsel %vm184, %v258, 0
  %269 = vmatprep.subr.mxu0 0.0
  %270 = vmatpush1.msra.mxu0 %v259
  %271 = vmatprep.subr.mxu0 0.0
  %272 = vmatpush1.msra.mxu0 %v260
  %273 = vmatprep.subr.mxu0 0.0
  %274 = vmatpush1.msra.mxu0 0.0
  %275 = vmatprep.subr.mxu0 0.0
  %276 = vmatpush1.msra.mxu0 0.0
  %277 = vmatprep.subr.mxu0 0.0
  %278 = vmatpush1.msra.mxu0 0.0
  %279 = vmatprep.subr.mxu0 0.0
  %280 = vmatpush1.msra.mxu0 0.0
  %281 = vmatprep.subr.mxu0 0.0
  %282 = vmatpush1.msra.mxu0 0.0
  %283 = vmatprep.subr.mxu0 0.0
  %284 = vmatpush1.msra.mxu0 0.0
  %285 = vmatprep.subr.mxu0 0.0
  %286 = vmatpush1.msra.mxu0 0.0
  %287 = vmatprep.subr.mxu0 0.0
  %288 = vmatpush1.msra.mxu0 0.0
  %289 = vmatprep.subr.mxu0 0.0
  %290 = vmatpush1.msra.mxu0 0.0
  %291 = vmatprep.subr.mxu0 0.0
  %292 = vmatpush1.msra.mxu0 0.0
  %293 = vmatprep.subr.mxu0 0.0
  %294 = vmatpush1.msra.mxu0 0.0
  %295 = vmatprep.subr.mxu0 0.0
  %296 = vmatpush1.msra.mxu0 0.0
  %297 = vmatprep.subr.mxu0 0.0
  %298 = vmatpush1.msra.mxu0 0.0
  %299 = vmatprep.subr.mxu0 0.0
  %300 = vmatpush1.msra.mxu0 0.0
  %301 = vmatprep.subr.mxu0 0.0
  %302 = vmatpush1.msra.mxu0 0.0
  %303 = vmatprep.subr.mxu0 0.0
  %304 = vmatpush1.msra.mxu0 0.0
  %305 = vmatprep.subr.mxu0 0.0
  %306 = vmatpush1.msra.mxu0 0.0
  %307 = vmatprep.subr.mxu0 0.0
  %308 = vmatpush1.msra.mxu0 0.0
  %309 = vmatprep.subr.mxu0 0.0
  %310 = vmatpush1.msra.mxu0 0.0
  %311 = vmatprep.subr.mxu0 0.0
  %312 = vmatpush1.msra.mxu0 0.0
  %313 = vmatprep.subr.mxu0 0.0
  %314 = vmatpush1.msra.mxu0 0.0
  %315 = vmatprep.subr.mxu0 0.0
  %316 = vmatpush1.msra.mxu0 0.0
  %317 = vmatprep.subr.mxu0 0.0
  %318 = vmatpush1.msra.mxu0 0.0
  %319 = vmatprep.subr.mxu0 0.0
  %320 = vmatpush1.msra.mxu0 0.0
  %321 = vmatprep.subr.mxu0 0.0
  %322 = vmatpush1.msra.mxu0 0.0
  %323 = vmatprep.subr.mxu0 0.0
  %324 = vmatpush1.msra.mxu0 0.0
  %325 = vmatprep.subr.mxu0 0.0
  %326 = vmatpush1.msra.mxu0 0.0
  %327 = vmatprep.subr.mxu0 0.0
  %328 = vmatpush1.msra.mxu0 0.0
  %329 = vmatprep.subr.mxu0 0.0
  %330 = vmatpush1.msra.mxu0 0.0
  %331 = vmatprep.subr.mxu0 0.0
  %332 = vmatpush1.msra.mxu0 0.0
  %333 = vmatprep.mubr.f32.mxu0 0.0
  %334 = vmatmul.mubr.f32.gmra.mrb[0].mxu0 %v267
  %v335 = vpop.f32.mrb[0].mxu0
  %v336 = vadd.f32 %v265, %v335
  %v337 = vpop.f32.mrb[0].mxu0
  %338 = vdwg.mxu0
  %vm339 = vcmask 25600
  %340 = vst.msk [vmem:[%s2] sm:$0x3] %vm339, %v336
  // Predicated region
  $region10: #{forward.1} parent=0 // pred_check
    _
  $region11: #{forward.1} parent=0 // pred_check_branch
    %342 = sbr.rel (0) target = $region13
  $region12: #{forward.1} parent=0 // pred_region
    _
  $region13: #{forward.1} parent=0 // pred_fallthru
    _
  // Predicated region
  $region14: #{forward.1} parent=0 // pred_check
    _
  $region15: #{forward.1} parent=0 // pred_check_branch
    %344 = sbr.rel (0) target = $region17
  $region16: #{forward.1} parent=0 // pred_region
    _
  $region17: #{forward.1} parent=0 // pred_fallthru
    _

</llo_original>
